<compile_context>
chip_gen: v5e
topology: v5e:2x2
jax: 0.10.0
libtpu: 0.0.40
codegen_flags: <defaults>
</compile_context>

<pallas_src>
import functools

import jax
import jax.numpy as jnp
from jax import lax
from jax.experimental import pallas as pl
from jax.experimental.pallas import tpu as pltpu


def _channel_attention_kernel(x_ref, w1t_ref, w2t_ref, o_ref, *, hw_true):
    # x_ref : (Nb, C, HWp) block of batch items (HWp = lane-padded spatial)
    # w1t_ref, w2t_ref : (C, C) 1x1-conv weights, pre-transposed to (in, out)
    x = x_ref[...].astype(jnp.float32)                    # f32 math throughout
    nb, c, hwp = x.shape

    # ---- adaptive avg / max pool over the spatial (lane) axis -----------
    # Padding lanes are zero, so the sum is unaffected; divide by TRUE HW.
    avg = jnp.sum(x, axis=-1) * (1.0 / hw_true)           # (Nb, C)

    if hwp != hw_true:
        lane = lax.broadcasted_iota(jnp.int32, (nb, c, hwp), dimension=2)
        x_for_max = jnp.where(lane < hw_true, x, -jnp.inf)
    else:
        x_for_max = x
    mx = jnp.max(x_for_max, axis=-1)                      # (Nb, C)

    # ---- fused MLP for both pooled branches (one pair of matmuls) -------
    p = jnp.concatenate([avg, mx], axis=0)                # (2*Nb, C)
    w1t = w1t_ref[...].astype(jnp.float32)                # (C_in, C_out)
    w2t = w2t_ref[...].astype(jnp.float32)
    h = jnp.maximum(jnp.dot(p, w1t, preferred_element_type=jnp.float32), 0.0)
    y = jnp.dot(h, w2t, preferred_element_type=jnp.float32)   # (2*Nb, C)

    gate = jax.nn.sigmoid(y[:nb] + y[nb:])                # (Nb, C)

    # ---- out = sigmoid(avg_out + max_out) * x (broadcast over spatial) ---
    o_ref[...] = (x * gate[:, :, None]).astype(o_ref.dtype)


def channel_attention(x_nchw, w1, w2, *, block_bytes_budget=3 * 1024 * 1024):
    """x_nchw: (N, C, H, W); w1, w2: (C, C, 1, 1) conv weights (no bias)."""
    N, C, H, W = x_nchw.shape
    HW = H * W
    HWp = max(128, ((HW + 127) // 128) * 128)             # lane-dense last dim

    x = x_nchw.reshape(N, C, HW)
    if HWp != HW:
        x = jnp.pad(x, ((0, 0), (0, 0), (0, HWp - HW)))    # zero pad (sum-safe)

    # Pre-transpose the 1x1-conv weights so the kernel does p @ w (no .T).
    w1t = jnp.transpose(w1.reshape(C, C))                  # (in, out)
    w2t = jnp.transpose(w2.reshape(C, C))

    # ---- pick Nb batch items per grid step (budget in f32 bytes, since the
    #      kernel upcasts); keep Nb a divisor of N so blocks stay full. -----
    item_bytes = C * HWp * 4
    nb = max(1, min(N, block_bytes_budget // max(1, item_bytes)))
    while N % nb:
        nb -= 1
    grid_n = N // nb

    itemsize = jnp.dtype(x.dtype).itemsize
    block_bytes = nb * C * HWp * itemsize
    # double-buffered input + output blocks + weights + f32 upcast headroom,
    # capped below v7x's 64 MiB physical VMEM.
    vmem_limit = 4 * block_bytes + 2 * nb * C * HWp * 4 + 2 * C * C * 4 + (4 << 20)
    vmem_limit = int(min(max(vmem_limit, 16 << 20), 60 << 20))

    kernel = functools.partial(_channel_attention_kernel, hw_true=HW)

    cost = pl.CostEstimate(
        flops=8 * N * C * C + 3 * N * C * HW,
        transcendentals=N * C,
        bytes_accessed=2 * N * C * HW * itemsize + 2 * C * C * itemsize,
    )

    out = pl.pallas_call(
        kernel,
        out_shape=jax.ShapeDtypeStruct((N, C, HWp), x.dtype),
        grid_spec=pltpu.PrefetchScalarGridSpec(
            num_scalar_prefetch=0,
            grid=(grid_n,),
            in_specs=[
                pl.BlockSpec((nb, C, HWp), lambda n: (n, 0, 0)),
                pl.BlockSpec((C, C), lambda n: (0, 0)),
                pl.BlockSpec((C, C), lambda n: (0, 0)),
            ],
            out_specs=pl.BlockSpec((nb, C, HWp), lambda n: (n, 0, 0)),
        ),
        compiler_params=pltpu.CompilerParams(
            dimension_semantics=("parallel",),
            vmem_limit_bytes=vmem_limit,
        ),
        cost_estimate=cost,
    )(x, w1t, w2t)

    if HWp != HW:
        out = out[:, :, :HW]
    return out.reshape(N, C, H, W)


def channel_attention_ref(x, w1, w2):
    """Plain-JAX reference matching the PyTorch forward."""
    C = x.shape[1]
    w1_2d = w1.reshape(C, C)
    w2_2d = w2.reshape(C, C)
    avg = jnp.mean(x, axis=(2, 3))                         # (N, C)
    mx = jnp.max(x, axis=(2, 3))                           # (N, C)

    def mlp(p):                                            # (N, C)
        h = jnp.maximum(p @ w1_2d.T, 0.0)
        return h @ w2_2d.T

    gate = jax.nn.sigmoid(mlp(avg) + mlp(mx))              # (N, C)
    return x * gate[:, :, None, None]


if __name__ == "__main__":
    key = jax.random.PRNGKey(0)
    kx, k1, k2 = jax.random.split(key, 3)

    N, C, H, W = 2, 4, 16, 16
    x = jax.random.normal(kx, (N, C, H, W), dtype=jnp.float32)

    # Deterministic synthetic conv weights (nn.Conv2d(C, C, 1, bias=False)).
    # NOTE: ratio=16 is unused in the original module's layer defs (both convs
    # are C->C), so we mirror that exactly.
    fan_in = C * 1 * 1
    bound = 1.0 / (fan_in ** 0.5)
    w1 = jax.random.uniform(k1, (C, C, 1, 1), jnp.float32, -bound, bound)
    w2 = jax.random.uniform(k2, (C, C, 1, 1), jnp.float32, -bound, bound)

    out = channel_attention(x, w1, w2)
    out = jax.block_until_ready(out)

    ref = channel_attention_ref(x, w1, w2)
    assert out.shape == (N, C, H, W)
    assert jnp.allclose(out, ref, atol=1e-5, rtol=1e-5), "mismatch vs reference"

    print("KERNEL_OK")
</pallas_src>

<mosaic_0001>
module attributes {stable_mosaic.version = 11 : i64} {
  func.func @_channel_attention_kernel(%arg0: i32, %arg1: memref<2x4x256xf32, #tpu.memory_space<vmem>>, %arg2: memref<4x4xf32, #tpu.memory_space<vmem>>, %arg3: memref<4x4xf32, #tpu.memory_space<vmem>>, %arg4: memref<2x4x256xf32, #tpu.memory_space<vmem>>) attributes {dimension_semantics = [#tpu.dimension_semantics<parallel>], iteration_bounds = array<i64: 1>, scalar_prefetch = 0 : i64, scratch_operands = 0 : i64, tpu.core_type = #tpu.core_type<tc>, window_params = [{transform_indices = @transform_0, window_bounds = array<i64: 2, 4, 256>}, {pipeline_mode = #tpu.pipeline_mode<synchronous>, transform_indices = @transform_1, window_bounds = array<i64: 4, 4>}, {pipeline_mode = #tpu.pipeline_mode<synchronous>, transform_indices = @transform_2, window_bounds = array<i64: 4, 4>}, {transform_indices = @transform_3, window_bounds = array<i64: 2, 4, 256>}]} {
    %c0 = arith.constant 0 : index
    %c0_0 = arith.constant 0 : index
    %c0_1 = arith.constant 0 : index
    %0 = vector.load %arg1[%c0, %c0_0, %c0_1] : memref<2x4x256xf32, #tpu.memory_space<vmem>>, vector<2x4x256xf32>
    %cst = arith.constant dense<0.000000e+00> : vector<2x4xf32>
    %1 = vector.multi_reduction <add>, %0, %cst [2] : vector<2x4x256xf32> to vector<2x4xf32>
    %cst_2 = arith.constant 3.906250e-03 : f32
    %2 = vector.broadcast %cst_2 : f32 to vector<2x4xf32>
    %3 = arith.mulf %1, %2 : vector<2x4xf32>
    %cst_3 = arith.constant dense<0xFF800000> : vector<2x4xf32>
    %4 = vector.multi_reduction <maximumf>, %0, %cst_3 [2] : vector<2x4x256xf32> to vector<2x4xf32>
    %5 = tpu.concatenate %3, %4 in 0 : vector<2x4xf32>, vector<2x4xf32> -> vector<4x4xf32>
    %c0_4 = arith.constant 0 : index
    %c0_5 = arith.constant 0 : index
    %6 = vector.load %arg2[%c0_4, %c0_5] : memref<4x4xf32, #tpu.memory_space<vmem>>, vector<4x4xf32>
    %c0_6 = arith.constant 0 : index
    %c0_7 = arith.constant 0 : index
    %7 = vector.load %arg3[%c0_6, %c0_7] : memref<4x4xf32, #tpu.memory_space<vmem>>, vector<4x4xf32>
    %cst_8 = arith.constant dense<0.000000e+00> : vector<4x4xf32>
    %8 = tpu.matmul %5, %6, %cst_8 {dimension_numbers = #tpu.dot_dimension_numbers<[1], [0], [0], [1], [0, 0, 1, 1], [], []>} : vector<4x4xf32>, vector<4x4xf32>, vector<4x4xf32> -> vector<4x4xf32>
    %cst_9 = arith.constant 0.000000e+00 : f32
    %9 = vector.broadcast %cst_9 : f32 to vector<4x4xf32>
    %10 = arith.maximumf %8, %9 : vector<4x4xf32>
    %cst_10 = arith.constant dense<0.000000e+00> : vector<4x4xf32>
    %11 = tpu.matmul %10, %7, %cst_10 {dimension_numbers = #tpu.dot_dimension_numbers<[1], [0], [0], [1], [0, 0, 1, 1], [], []>} : vector<4x4xf32>, vector<4x4xf32>, vector<4x4xf32> -> vector<4x4xf32>
    %12 = vector.extract_strided_slice %11 {offsets = [0, 0], sizes = [2, 4], strides = [1, 1]} : vector<4x4xf32> to vector<2x4xf32>
    %13 = vector.extract_strided_slice %11 {offsets = [2, 0], sizes = [2, 4], strides = [1, 1]} : vector<4x4xf32> to vector<2x4xf32>
    %14 = arith.addf %12, %13 : vector<2x4xf32>
    %15 = arith.negf %14 : vector<2x4xf32>
    %16 = math.exp %15 : vector<2x4xf32>
    %cst_11 = arith.constant 1.000000e+00 : f32
    %17 = vector.broadcast %cst_11 : f32 to vector<2x4xf32>
    %18 = arith.addf %17, %16 : vector<2x4xf32>
    %19 = arith.divf %17, %18 : vector<2x4xf32>
    %20 = vector.shape_cast %19 : vector<2x4xf32> to vector<2x4x1xf32>
    %21 = vector.broadcast %20 : vector<2x4x1xf32> to vector<2x4x256xf32>
    %22 = arith.mulf %0, %21 : vector<2x4x256xf32>
    %c0_12 = arith.constant 0 : index
    %c0_13 = arith.constant 0 : index
    %c0_14 = arith.constant 0 : index
    %23 = vector.load %arg4[%c0_12, %c0_13, %c0_14] : memref<2x4x256xf32, #tpu.memory_space<vmem>>, vector<2x4x256xf32>
    tpu.vector_store %arg4[%c0_12, %c0_13, %c0_14], %22 {strides = array<i32>} : memref<2x4x256xf32, #tpu.memory_space<vmem>>, vector<2x4x256xf32>,
    return
  }
  func.func @transform_0(%arg0: i32) -> (i32, i32, i32) {
    %c0_i32 = arith.constant 0 : i32
    %c0_i32_0 = arith.constant 0 : i32
    %c0_i32_1 = arith.constant 0 : i32
    return %arg0, %c0_i32, %c0_i32_0 : i32, i32, i32
  }
  func.func @transform_1(%arg0: i32) -> (i32, i32) {
    %c0_i32 = arith.constant 0 : i32
    %c0_i32_0 = arith.constant 0 : i32
    %c0_i32_1 = arith.constant 0 : i32
    return %c0_i32, %c0_i32_0 : i32, i32
  }
  func.func @transform_2(%arg0: i32) -> (i32, i32) {
    %c0_i32 = arith.constant 0 : i32
    %c0_i32_0 = arith.constant 0 : i32
    %c0_i32_1 = arith.constant 0 : i32
    return %c0_i32, %c0_i32_0 : i32, i32
  }
  func.func @transform_3(%arg0: i32) -> (i32, i32, i32) {
    %c0_i32 = arith.constant 0 : i32
    %c0_i32_0 = arith.constant 0 : i32
    %c0_i32_1 = arith.constant 0 : i32
    return %arg0, %c0_i32, %c0_i32_0 : i32, i32, i32
  }
}

</mosaic_0001>

<llo_original>
// kernel: tpu_custom_call.1
$region0: #{tpu_custom_call.1}
  #allocation0 [shape = 'u32[]', space=smem, size = 0x4, offset = 0x4, fixed_abs, tag = 'smem constant byte address 0x4 - core index']
  #allocation1 [shape = 'u32[72,128]{1,0:T(1,128)}', space=vmem, size = 0x9000, scoped, tag = 'internal scratch']
  %s0 = inlined_call_operand.hbm [shape: f32[2,4,256], index: 0, kind: input, shape index: {}]
  %s1 = inlined_call_operand.hbm [shape: f32[4,4], index: 1, kind: input, shape index: {}]
  %s2 = inlined_call_operand.hbm [shape: f32[4,4], index: 2, kind: input, shape index: {}]
  %s3 = inlined_call_operand.hbm [shape: f32[2,4,256], index: 3, kind: output, shape index: {}]
  %s4 = sld [smem:[#allocation0]]
  $region34: #{tpu_custom_call.1} parent=0
    _
  %s6 = ssub.s32 1, %s4
  %s7 = scalar_select 0, %s6, %s4
  $region1: #{tpu_custom_call.1} parent=0
    #allocation2 [shape = 'u8[8192]{0}', space=vmem, size = 0x2000, scoped, tag = 'input window, operand 0, single buffered']
    #allocation3 [shape = 's32[1]{0}', space=sflag, size = 0x4, scoped, tag = 'scoped memory for tpu_custom_call.1']
    #allocation4 [shape = 's32[1]{0}', space=sflag, size = 0x4, scoped, tag = 'scoped memory for tpu_custom_call.1']
    #allocation5 [shape = 'u8[2048]{0}', space=vmem, size = 0x800, scoped, tag = 'input window, operand 1, single buffered']
    #allocation6 [shape = 's32[1]{0}', space=sflag, size = 0x4, scoped, tag = 'scoped memory for tpu_custom_call.1']
    #allocation7 [shape = 'u8[2048]{0}', space=vmem, size = 0x800, scoped, tag = 'input window, operand 2, single buffered']
    #allocation8 [shape = 'u8[8192]{0}', space=vmem, size = 0x2000, scoped, tag = 'output window, operand 0, single buffered']
    %8 = vsyncpa [#allocation3], 0
    %9 = vsyncpa [#allocation6], 0
    %10 = vsyncpa [#allocation4], 0
    // Predicated region
    $region2: #{tpu_custom_call.1} parent=1 // pred_check
      _
    $region3: #{tpu_custom_call.1} parent=1 // pred_check_branch
      %12 = sbr.rel (0) target = $region5
    $region4: #{tpu_custom_call.1} parent=1 // pred_region
      %14 = vsyncadd [#allocation3], 0
      %s15 = sshll.u32 %s0, 4
      %s16 = int_to_ptr.hbm [resolvable:$true] %s15
      %s17 = sshll.u32 [#allocation2], 4
      %s18 = int_to_ptr.vmem [resolvable:$true] %s17
      %23 = dma.hbm_to_vmem [thread:$0]  %s16, 256, %s18, [#allocation3], 128, 128, 8
    $region5: #{tpu_custom_call.1} parent=1 // pred_fallthru
      _
    // Predicated region
    $region6: #{tpu_custom_call.1} parent=1 // pred_check
      _
    $region7: #{tpu_custom_call.1} parent=1 // pred_check_branch
      %25 = sbr.rel (0) target = $region9
    $region8: #{tpu_custom_call.1} parent=1 // pred_region
      %27 = vsyncadd [#allocation6], 0
      %s29 = sshll.u32 %s1, 4
      %s30 = int_to_ptr.hbm [resolvable:$true] %s29
      %s31 = sshll.u32 [#allocation5], 4
      %s32 = int_to_ptr.vmem [resolvable:$true] %s31
      %34 = dma.hbm_to_vmem [thread:$0]  %s30, 64, %s32, [#allocation6]
    $region9: #{tpu_custom_call.1} parent=1 // pred_fallthru
      _
    // Predicated region
    $region10: #{tpu_custom_call.1} parent=1 // pred_check
      _
    $region11: #{tpu_custom_call.1} parent=1 // pred_check_branch
      %36 = sbr.rel (0) target = $region13
    $region12: #{tpu_custom_call.1} parent=1 // pred_region
      %38 = vsyncadd [#allocation6], 0
      %s40 = sshll.u32 %s2, 4
      %s41 = int_to_ptr.hbm [resolvable:$true] %s40
      %s42 = sshll.u32 [#allocation7], 4
      %s43 = int_to_ptr.vmem [resolvable:$true] %s42
      %45 = dma.hbm_to_vmem [thread:$0]  %s41, 64, %s43, [#allocation6]
    $region13: #{tpu_custom_call.1} parent=1 // pred_fallthru
      _
    // Predicated region
    $region14: #{tpu_custom_call.1} parent=1 // pred_check
      _
    $region15: #{tpu_custom_call.1} parent=1 // pred_check_branch
      %47 = sbr.rel (0) target = $region17
    $region16: #{tpu_custom_call.1} parent=1 // pred_region
      %49 = dma.done [#allocation3], 256
    $region17: #{tpu_custom_call.1} parent=1 // pred_fallthru
      _
    // Predicated region
    $region18: #{tpu_custom_call.1} parent=1 // pred_check
      _
    $region19: #{tpu_custom_call.1} parent=1 // pred_check_branch
      %51 = sbr.rel (0) target = $region21
    $region20: #{tpu_custom_call.1} parent=1 // pred_region
      %53 = dma.done [#allocation6], 64
    $region21: #{tpu_custom_call.1} parent=1 // pred_fallthru
      _
    // Predicated region
    $region22: #{tpu_custom_call.1} parent=1 // pred_check
      _
    $region23: #{tpu_custom_call.1} parent=1 // pred_check_branch
      %55 = sbr.rel (0) target = $region25
    $region24: #{tpu_custom_call.1} parent=1 // pred_region
      %57 = dma.done [#allocation6], 64
    $region25: #{tpu_custom_call.1} parent=1 // pred_fallthru
      _
    %v58 = vld [vmem:[#allocation2] sm:$0xff]
    %v59 = vld [vmem:[#allocation2 + $0x8] sm:$0xff]
    %62 = vst [vmem:[#allocation1] ss:$2 sm:$0xff] %v58
    %v63 = vld.sshfl [vmem:[#allocation1] sm:$0xff pattern:$0x75316420]
    %v64 = vld.sshfl [vmem:[#allocation1 + $0x8] sm:$0xff pattern:$0x75316420]
    %s65 = scalar_lea.vmem [#allocation1], 16
    %66 = vst [vmem:[%s65] ss:$2 sm:$0xff] %v59
    %v67 = vld.sshfl [vmem:[#allocation1 + $0x10] sm:$0xff pattern:$0x75316420]
    %v68 = vld.sshfl [vmem:[#allocation1 + $0x18] sm:$0xff pattern:$0x75316420]
    %vm73 = vcmask 1043456
    %v74 = vsel %vm73, %v63, 0.0
    %v75 = vsel %vm73, %v64, 0.0
    %v76 = vadd.f32 %v74, %v75
    %77 = vadd.xlane.f32.xlu0 %v76
    %v78 = vpop.xlane.xlu0 %77
    %v79 = vsel %vm73, %v67, 0.0
    %v80 = vsel %vm73, %v68, 0.0
    %v81 = vadd.f32 %v79, %v80
    %82 = vadd.xlane.f32.xlu0 %v81
    %v83 = vpop.xlane.xlu0 %82
    %v84 = vmul.f32 %v78, 0.00390625
    %v85 = vmul.f32 %v83, 0.00390625
    %86 = vst [vmem:[#allocation1] ss:$2 sm:$0xff] %v58
    %v87 = vld.sshfl [vmem:[#allocation1] sm:$0xff pattern:$0x75316420]
    %v88 = vld.sshfl [vmem:[#allocation1 + $0x8] sm:$0xff pattern:$0x75316420]
    %s89 = scalar_lea.vmem [#allocation1], 16
    %90 = vst [vmem:[%s89] ss:$2 sm:$0xff] %v59
    %v91 = vld.sshfl [vmem:[#allocation1 + $0x10] sm:$0xff pattern:$0x75316420]
    %v92 = vld.sshfl [vmem:[#allocation1 + $0x18] sm:$0xff pattern:$0x75316420]
    %v97 = vsel %vm73, %v87, -inf
    %v98 = vsel %vm73, %v88, -inf
    %v99 = vmax.f32 %v97, %v98
    %100 = vmax.xlane.f32.xlu0 %v99
    %v101 = vpop.xlane.xlu0 %100
    %v102 = vsel %vm73, %v91, -inf
    %v103 = vsel %vm73, %v92, -inf
    %v104 = vmax.f32 %v102, %v103
    %105 = vmax.xlane.f32.xlu0 %v104
    %v106 = vpop.xlane.xlu0 %105
    %v109 = vlaneseq
    %v110 = vand.u32 %v109, 127
    %v111 = vperm.slane %v84, %v110
    %v112 = vperm.slane %v85, %v110
    %vm113 = vcmask 1041409
    %v114 = vsel %vm113, %v112, %v111
    %v118 = vperm.slane %v101, %v110
    %v119 = vperm.slane %v106, %v110
    %vm120 = vcmask 1043459
    %v121 = vsel %vm120, %v119, %v118
    %vm123 = vcmask 1041408
    %v124 = vsel %vm123, %v114, %v121
    %v125 = vld [vmem:[#allocation5] sm:$0xf]
    %v126 = vld [vmem:[#allocation7] sm:$0xf]
    %vm127 = vcmask 31744
    %v129 = vsel %vm127, %v124, 0
    %v132 = vsel %vm73, %v125, 0
    %134 = vmatpush.msra.mxu0 0.0
    %135 = vmatpush.msra.mxu0 0.0
    %136 = vmatpush.msra.mxu0 0.0
    %137 = vmatpush.msra.mxu0 0.0
    %138 = vmatpush.msra.mxu0 0.0
    %139 = vmatpush.msra.mxu0 0.0
    %140 = vmatpush.msra.mxu0 0.0
    %141 = vmatpush.msra.mxu0 0.0
    %142 = vmatpush.msra.mxu0 0.0
    %143 = vmatpush.msra.mxu0 0.0
    %144 = vmatpush.msra.mxu0 0.0
    %145 = vmatpush.msra.mxu0 0.0
    %146 = vmatpush.msra.mxu0 0.0
    %147 = vmatpush.msra.mxu0 0.0
    %148 = vmatpush.msra.mxu0 0.0
    %149 = vmatpush.msra.mxu0 %v132
    %150 = vmatmul.f32.gmra.mxu0 %v129
    %v151 = vpop.f32.mrf.mxu0
    %v152 = vadd.f32 0.0, %v151
    %153 = vdwg.mxu0
    %v154 = vmax.f32 %v152, 0.0
    %v156 = vsel %vm127, %v154, 0
    %v159 = vsel %vm73, %v126, 0
    %161 = vmatpush.msra.mxu0 0.0
    %162 = vmatpush.msra.mxu0 0.0
    %163 = vmatpush.msra.mxu0 0.0
    %164 = vmatpush.msra.mxu0 0.0
    %165 = vmatpush.msra.mxu0 0.0
    %166 = vmatpush.msra.mxu0 0.0
    %167 = vmatpush.msra.mxu0 0.0
    %168 = vmatpush.msra.mxu0 0.0
    %169 = vmatpush.msra.mxu0 0.0
    %170 = vmatpush.msra.mxu0 0.0
    %171 = vmatpush.msra.mxu0 0.0
    %172 = vmatpush.msra.mxu0 0.0
    %173 = vmatpush.msra.mxu0 0.0
    %174 = vmatpush.msra.mxu0 0.0
    %175 = vmatpush.msra.mxu0 0.0
    %176 = vmatpush.msra.mxu0 %v159
    %177 = vmatmul.f32.gmra.mxu0 %v156
    %v178 = vpop.f32.mrf.mxu0
    %v179 = vadd.f32 0.0, %v178
    %180 = vdwg.mxu0
    %v182 = vrot.slane %v179, 2
    %v184 = vadd.f32 %v179, %v182
    %v185 = vxor.u32 %v184, 2147483648
    %v186 = vmul.f32 %v185, 1.442695
    %v187 = vpow.pop %v186
    %v188 = vadd.f32 %v187, 1.0
    %v189 = vrcp.pop %v188
    %v190 = vmul.f32 %v188, %v189
    %v191 = vsub.f32 1.0, %v190
    %v192 = vmul.f32 %v189, %v191
    %v193 = vadd.f32 %v189, %v192
    %vm194 = vweird.f32 %v188
    %vm195 = vweird.f32 %v189
    %vm196 = vmor %vm194, %vm195
    %v197 = vsel %vm196, %v189, %v193
    %v198 = vand.u32 2147483647, %v188
    %vm199 = vcmp.eq.f32.partialorder %v198, 8.507059e+37
    %v200 = vand.u32 %v188, 2147483648
    %v201 = vor.u32 1.1754944e-38, %v200
    %v202 = vsel %vm199, %v201, %v197
    %v203 = vmul.f32 1.0, %v202
    %v204 = vperm.slane %v203, 0
    %v205 = vlaneseq
    %v206 = vshrl.u32 %v205, 7
    %208 = vset.pattern.permute.xlu0 %v206
    %209 = vperm.xlu0 %208, %v204
    %v210 = vpop.permute.xlu0 %209
    %v211 = vperm.slane %v203, 1
    %v212 = vlaneseq
    %v213 = vshrl.u32 %v212, 7
    %215 = vset.pattern.permute.xlu0 %v213
    %216 = vperm.xlu0 %215, %v211
    %v217 = vpop.permute.xlu0 %216
    %v221 = vunpack.c.l.s4 839922192
    %v222 = vunpack.c.0.s8 %v221
    %v223 = vperm.slane %v210, %v222
    %v225 = vunpack.c.l.s4 839922192
    %v226 = vunpack.c.0.s8 %v225
    %v227 = vperm.slane %v217, %v226
    %v230 = vmul.f32 %v58, %v223
    %v231 = vmul.f32 %v59, %v227
    %232 = vst [vmem:[#allocation8] sm:$0xff] %v230
    %233 = vst [vmem:[#allocation8 + $0x8] sm:$0xff] %v231
    // Predicated region
    $region26: #{tpu_custom_call.1} parent=1 // pred_check
      _
    $region27: #{tpu_custom_call.1} parent=1 // pred_check_branch
      %235 = sbr.rel (0) target = $region29
    $region28: #{tpu_custom_call.1} parent=1 // pred_region
      %237 = vsyncadd [#allocation4], 0
      %s238 = sshll.u32 [#allocation8], 4
      %s239 = int_to_ptr.vmem [resolvable:$true] %s238
      %s240 = sshll.u32 %s3, 4
      %s241 = int_to_ptr.hbm [resolvable:$true] %s240
      %246 = dma.vmem_to_hbm [thread:$0]  %s239, 256, %s241, [#allocation4], 128, 128, 8
    $region29: #{tpu_custom_call.1} parent=1 // pred_fallthru
      _
    // Predicated region
    $region30: #{tpu_custom_call.1} parent=1 // pred_check
      _
    $region31: #{tpu_custom_call.1} parent=1 // pred_check_branch
      %248 = sbr.rel (0) target = $region33
    $region32: #{tpu_custom_call.1} parent=1 // pred_region
      %250 = dma.done [#allocation4], 256
    $region33: #{tpu_custom_call.1} parent=1 // pred_fallthru
      _
    %251 = vsyncpa [#allocation3], 1
    %252 = vsyncpa [#allocation6], 1
    %253 = vsyncpa [#allocation4], 1

</llo_original>
